<compile_context>
chip_gen: v6e
topology: v6e:2x2x1
jax: 0.10.0
libtpu: 0.0.40
codegen_flags: <defaults>
</compile_context>

<pallas_src>
import jax
import jax.numpy as jnp
from jax.experimental import pallas as pl
from jax.experimental.pallas import tpu as pltpu


def _round_up(x, m):
    return ((x + m - 1) // m) * m


def qnetwork_kernel(x_ref, w1_ref, b1_ref, w2_ref, b2_ref, out_ref):
    # fc1 (MXU, f32 acc) + bias + ReLU (VPU, f32) + fc2 (MXU, f32 acc) + bias.
    h = jnp.dot(x_ref[...], w1_ref[...], preferred_element_type=jnp.float32)
    h = jnp.maximum(h + b1_ref[...], 0.0)
    y = jnp.dot(h, w2_ref[...], preferred_element_type=jnp.float32)
    out_ref[...] = (y + b2_ref[...]).astype(out_ref.dtype)


def qnetwork_forward(x, w1, b1, w2, b2, *, block_b=1024):
    """y = relu(x @ w1 + b1) @ w2 + b2   (PyTorch QNetwork forward)."""
    B, S = x.shape
    H = w1.shape[1]
    A = w2.shape[1]
    b1 = b1.reshape(1, H)
    b2 = b2.reshape(1, A)

    # Batch tile choice:
    #  * roughly block_b rows (>=512-row tiles sit near the HBM roofline and
    #    amortize per-grid-step pipeline overhead),
    #  * at least 2 grid steps when the batch allows, so the "parallel" batch
    #    axis has iterations to shard across both TensorCores on v7x,
    #  * cdiv-derived so the last (partial) tile wastes < 8 rows of work.
    n_tiles = max(pl.cdiv(B, block_b), min(2, pl.cdiv(B, 8)))
    TB = min(B, _round_up(pl.cdiv(B, n_tiles), 8))
    grid = (pl.cdiv(B, TB),)

    in_specs = [
        pl.BlockSpec((TB, S), lambda i: (i, 0)),   # batch-tiled activations
        # Weights / biases: constant index_map -> fetched once, VMEM-resident
        # across all grid steps.  (pl.Buffered(1) would halve their footprint;
        # at these sizes the buffers are a few KiB, so the default is kept.)
        pl.BlockSpec((S, H), lambda i: (0, 0)),
        pl.BlockSpec((1, H), lambda i: (0, 0)),
        pl.BlockSpec((H, A), lambda i: (0, 0)),
        pl.BlockSpec((1, A), lambda i: (0, 0)),
    ]
    out_spec = pl.BlockSpec((TB, A), lambda i: (i, 0))

    itemsize = jnp.dtype(jnp.float32).itemsize
    # Double-buffered x / out tiles + (double-buffered) weights & biases,
    # with 2x headroom for Mosaic-internal scratch.
    working_set = (2 * TB * (S + A) + 2 * (S * H + H * A + H + A)) * itemsize
    vmem_limit = int(max(4 * 1024 * 1024, min(2 * working_set, 32 * 1024 * 1024)))

    cost = pl.CostEstimate(
        flops=2 * B * (S * H + H * A),
        transcendentals=0,
        bytes_accessed=itemsize * (B * S + S * H + H + H * A + A + B * A),
    )

    # Output stays in x.dtype (f32) to preserve module semantics; a bf16
    # out_shape would halve writeback bytes (helps most on v5e) if acceptable.
    return pl.pallas_call(
        qnetwork_kernel,
        out_shape=jax.ShapeDtypeStruct((B, A), x.dtype),
        grid=grid,
        in_specs=in_specs,
        out_specs=out_spec,
        compiler_params=pltpu.CompilerParams(
            dimension_semantics=("parallel",),   # dual-TC shard on v7x
            vmem_limit_bytes=vmem_limit,
        ),
        cost_estimate=cost,
    )(x, w1, b1, w2, b2)


if __name__ == "__main__":
    # Shapes implied by QNetwork(state_size, action_size, hidden_size).
    batch = 8
    state_size = 16
    hidden_size = 32
    action_size = 4

    key = jax.random.PRNGKey(0)
    kx, k1, kb1, k2, kb2 = jax.random.split(key, 5)

    # Deterministic synthetic parameters (PyTorch-Linear-like uniform init),
    # stored as (in_features, out_features) = W.T of nn.Linear.weight.
    lim1 = 1.0 / (state_size ** 0.5)
    lim2 = 1.0 / (hidden_size ** 0.5)
    w1 = jax.random.uniform(k1, (state_size, hidden_size), jnp.float32, -lim1, lim1)
    b1 = jax.random.uniform(kb1, (hidden_size,), jnp.float32, -lim1, lim1)
    w2 = jax.random.uniform(k2, (hidden_size, action_size), jnp.float32, -lim2, lim2)
    b2 = jax.random.uniform(kb2, (action_size,), jnp.float32, -lim2, lim2)

    x = jax.random.normal(kx, (batch, state_size), jnp.float32)

    out = jax.jit(qnetwork_forward)(x, w1, b1, w2, b2)
    jax.block_until_ready(out)
    assert out.shape == (batch, action_size)

    # Pure-f32 PyTorch-equivalent reference.
    ref = jnp.maximum(x @ w1 + b1, 0.0) @ w2 + b2
    max_err = float(jnp.max(jnp.abs(out - ref)))
    assert jnp.allclose(out, ref, atol=2e-2, rtol=2e-2), max_err

    print("KERNEL_OK")
</pallas_src>

<mosaic_0001>
module attributes {stable_mosaic.version = 11 : i64} {
  func.func @qnetwork_kernel(%arg0: i32, %arg1: memref<8x16xf32, #tpu.memory_space<vmem>>, %arg2: memref<16x32xf32, #tpu.memory_space<vmem>>, %arg3: memref<1x32xf32, #tpu.memory_space<vmem>>, %arg4: memref<32x4xf32, #tpu.memory_space<vmem>>, %arg5: memref<1x4xf32, #tpu.memory_space<vmem>>, %arg6: memref<8x4xf32, #tpu.memory_space<vmem>>) attributes {dimension_semantics = [#tpu.dimension_semantics<parallel>], iteration_bounds = array<i64: 1>, scalar_prefetch = 0 : i64, scratch_operands = 0 : i64, tpu.core_type = #tpu.core_type<tc>, window_params = [{transform_indices = @transform_0, window_bounds = array<i64: 8, 16>}, {pipeline_mode = #tpu.pipeline_mode<synchronous>, transform_indices = @transform_1, window_bounds = array<i64: 16, 32>}, {pipeline_mode = #tpu.pipeline_mode<synchronous>, transform_indices = @transform_2, window_bounds = array<i64: 1, 32>}, {pipeline_mode = #tpu.pipeline_mode<synchronous>, transform_indices = @transform_3, window_bounds = array<i64: 32, 4>}, {pipeline_mode = #tpu.pipeline_mode<synchronous>, transform_indices = @transform_4, window_bounds = array<i64: 1, 4>}, {transform_indices = @transform_5, window_bounds = array<i64: 8, 4>}]} {
    %c0 = arith.constant 0 : index
    %c0_0 = arith.constant 0 : index
    %0 = vector.load %arg1[%c0, %c0_0] : memref<8x16xf32, #tpu.memory_space<vmem>>, vector<8x16xf32>
    %c0_1 = arith.constant 0 : index
    %c0_2 = arith.constant 0 : index
    %1 = vector.load %arg2[%c0_1, %c0_2] : memref<16x32xf32, #tpu.memory_space<vmem>>, vector<16x32xf32>
    %cst = arith.constant dense<0.000000e+00> : vector<8x32xf32>
    %2 = tpu.matmul %0, %1, %cst {dimension_numbers = #tpu.dot_dimension_numbers<[1], [0], [0], [1], [0, 0, 1, 1], [], []>} : vector<8x16xf32>, vector<16x32xf32>, vector<8x32xf32> -> vector<8x32xf32>
    %c0_3 = arith.constant 0 : index
    %c0_4 = arith.constant 0 : index
    %3 = vector.load %arg3[%c0_3, %c0_4] : memref<1x32xf32, #tpu.memory_space<vmem>>, vector<1x32xf32>
    %4 = vector.broadcast %3 : vector<1x32xf32> to vector<8x32xf32>
    %5 = arith.addf %2, %4 : vector<8x32xf32>
    %cst_5 = arith.constant 0.000000e+00 : f32
    %6 = vector.broadcast %cst_5 : f32 to vector<8x32xf32>
    %7 = arith.maximumf %5, %6 : vector<8x32xf32>
    %c0_6 = arith.constant 0 : index
    %c0_7 = arith.constant 0 : index
    %8 = vector.load %arg4[%c0_6, %c0_7] : memref<32x4xf32, #tpu.memory_space<vmem>>, vector<32x4xf32>
    %cst_8 = arith.constant dense<0.000000e+00> : vector<8x4xf32>
    %9 = tpu.matmul %7, %8, %cst_8 {dimension_numbers = #tpu.dot_dimension_numbers<[1], [0], [0], [1], [0, 0, 1, 1], [], []>} : vector<8x32xf32>, vector<32x4xf32>, vector<8x4xf32> -> vector<8x4xf32>
    %c0_9 = arith.constant 0 : index
    %c0_10 = arith.constant 0 : index
    %10 = vector.load %arg5[%c0_9, %c0_10] : memref<1x4xf32, #tpu.memory_space<vmem>>, vector<1x4xf32>
    %11 = vector.broadcast %10 : vector<1x4xf32> to vector<8x4xf32>
    %12 = arith.addf %9, %11 : vector<8x4xf32>
    %c0_11 = arith.constant 0 : index
    %c0_12 = arith.constant 0 : index
    %13 = vector.load %arg6[%c0_11, %c0_12] : memref<8x4xf32, #tpu.memory_space<vmem>>, vector<8x4xf32>
    tpu.vector_store %arg6[%c0_11, %c0_12], %12 {strides = array<i32>} : memref<8x4xf32, #tpu.memory_space<vmem>>, vector<8x4xf32>,
    return
  }
  func.func @transform_0(%arg0: i32) -> (i32, i32) {
    %c0_i32 = arith.constant 0 : i32
    %c0_i32_0 = arith.constant 0 : i32
    return %arg0, %c0_i32 : i32, i32
  }
  func.func @transform_1(%arg0: i32) -> (i32, i32) {
    %c0_i32 = arith.constant 0 : i32
    %c0_i32_0 = arith.constant 0 : i32
    %c0_i32_1 = arith.constant 0 : i32
    return %c0_i32, %c0_i32_0 : i32, i32
  }
  func.func @transform_2(%arg0: i32) -> (i32, i32) {
    %c0_i32 = arith.constant 0 : i32
    %c0_i32_0 = arith.constant 0 : i32
    %c0_i32_1 = arith.constant 0 : i32
    return %c0_i32, %c0_i32_0 : i32, i32
  }
  func.func @transform_3(%arg0: i32) -> (i32, i32) {
    %c0_i32 = arith.constant 0 : i32
    %c0_i32_0 = arith.constant 0 : i32
    %c0_i32_1 = arith.constant 0 : i32
    return %c0_i32, %c0_i32_0 : i32, i32
  }
  func.func @transform_4(%arg0: i32) -> (i32, i32) {
    %c0_i32 = arith.constant 0 : i32
    %c0_i32_0 = arith.constant 0 : i32
    %c0_i32_1 = arith.constant 0 : i32
    return %c0_i32, %c0_i32_0 : i32, i32
  }
  func.func @transform_5(%arg0: i32) -> (i32, i32) {
    %c0_i32 = arith.constant 0 : i32
    %c0_i32_0 = arith.constant 0 : i32
    return %arg0, %c0_i32 : i32, i32
  }
}

</mosaic_0001>

<llo_original>
// kernel: qnetwork_forward.1
$region0: #{qnetwork_forward.1}
  #allocation0 [shape = 'u32[]', space=smem, size = 0x4, offset = 0x4, fixed_abs, tag = 'smem constant byte address 0x4 - core index']
  #allocation1 [shape = 'u32[144,128]{1,0:T(1,128)}', space=vmem, size = 0x12000, scoped, tag = 'internal scratch']
  %s0 = inlined_call_operand.vmem [shape: f32[8,16], index: 0, kind: input, shape index: {}]
  %s1 = inlined_call_operand.vmem [shape: f32[16,32], index: 1, kind: input, shape index: {}]
  %s2 = inlined_call_operand.vmem [shape: f32[1,32], index: 2, kind: input, shape index: {}]
  %s3 = inlined_call_operand.vmem [shape: f32[32,4], index: 3, kind: input, shape index: {}]
  %s4 = inlined_call_operand.vmem [shape: f32[1,4], index: 4, kind: input, shape index: {}]
  %s5 = inlined_call_operand.vmem [shape: f32[8,4], index: 5, kind: output, shape index: {}]
  %s6 = sld [smem:[#allocation0]]
  $region30: #{qnetwork_forward.1} parent=0
    _
  %s8 = ssub.s32 1, %s6
  %s9 = scalar_select 0, %s8, %s6
  // Predicated region
  $region2: #{qnetwork_forward.1} parent=0 // pred_check
    _
  $region3: #{qnetwork_forward.1} parent=0 // pred_check_branch
    %11 = sbr.rel (0) target = $region5
  $region4: #{qnetwork_forward.1} parent=0 // pred_region
    _
  $region5: #{qnetwork_forward.1} parent=0 // pred_fallthru
    _
  // Predicated region
  $region6: #{qnetwork_forward.1} parent=0 // pred_check
    _
  $region7: #{qnetwork_forward.1} parent=0 // pred_check_branch
    %13 = sbr.rel (0) target = $region9
  $region8: #{qnetwork_forward.1} parent=0 // pred_region
    _
  $region9: #{qnetwork_forward.1} parent=0 // pred_fallthru
    _
  // Predicated region
  $region10: #{qnetwork_forward.1} parent=0 // pred_check
    _
  $region11: #{qnetwork_forward.1} parent=0 // pred_check_branch
    %15 = sbr.rel (0) target = $region13
  $region12: #{qnetwork_forward.1} parent=0 // pred_region
    _
  $region13: #{qnetwork_forward.1} parent=0 // pred_fallthru
    _
  // Predicated region
  $region14: #{qnetwork_forward.1} parent=0 // pred_check
    _
  $region15: #{qnetwork_forward.1} parent=0 // pred_check_branch
    %17 = sbr.rel (0) target = $region17
  $region16: #{qnetwork_forward.1} parent=0 // pred_region
    _
  $region17: #{qnetwork_forward.1} parent=0 // pred_fallthru
    _
  // Predicated region
  $region18: #{qnetwork_forward.1} parent=0 // pred_check
    _
  $region19: #{qnetwork_forward.1} parent=0 // pred_check_branch
    %19 = sbr.rel (0) target = $region21
  $region20: #{qnetwork_forward.1} parent=0 // pred_region
    _
  $region21: #{qnetwork_forward.1} parent=0 // pred_fallthru
    _
  %v20 = vld [vmem:[%s0] sm:$0xff]
  %v21 = vld [vmem:[%s1] sm:$0xff]
  %v22 = vld [vmem:[%s1 + $0x8] sm:$0xff]
  %v23 = vld [vmem:[%s2] sm:$0x1]
  %v25 = vlaneseq
  %v26 = vshrl.u32 %v25, 7
  %v27 = vsub.s32 0, %v26
  %v28 = vrot.slane %v23, %v27
  %vm30 = vcmask 130048
  %v32 = vsel %vm30, %v20, 0
  %34 = vmatprep.subr.mxu0 0.0
  %35 = vmatpush1.msra.mxu0 0.0
  %36 = vmatprep.subr.mxu0 0.0
  %37 = vmatpush1.msra.mxu0 0.0
  %38 = vmatprep.subr.mxu0 0.0
  %39 = vmatpush1.msra.mxu0 0.0
  %40 = vmatprep.subr.mxu0 0.0
  %41 = vmatpush1.msra.mxu0 0.0
  %42 = vmatprep.subr.mxu0 0.0
  %43 = vmatpush1.msra.mxu0 0.0
  %44 = vmatprep.subr.mxu0 0.0
  %45 = vmatpush1.msra.mxu0 0.0
  %46 = vmatprep.subr.mxu0 0.0
  %47 = vmatpush1.msra.mxu0 0.0
  %48 = vmatprep.subr.mxu0 0.0
  %49 = vmatpush1.msra.mxu0 0.0
  %50 = vmatprep.subr.mxu0 0.0
  %51 = vmatpush1.msra.mxu0 0.0
  %52 = vmatprep.subr.mxu0 0.0
  %53 = vmatpush1.msra.mxu0 0.0
  %54 = vmatprep.subr.mxu0 0.0
  %55 = vmatpush1.msra.mxu0 0.0
  %56 = vmatprep.subr.mxu0 0.0
  %57 = vmatpush1.msra.mxu0 0.0
  %58 = vmatprep.subr.mxu0 0.0
  %59 = vmatpush1.msra.mxu0 0.0
  %60 = vmatprep.subr.mxu0 0.0
  %61 = vmatpush1.msra.mxu0 0.0
  %62 = vmatprep.subr.mxu0 0.0
  %63 = vmatpush1.msra.mxu0 %v22
  %64 = vmatprep.subr.mxu0 0.0
  %65 = vmatpush1.msra.mxu0 %v21
  %66 = vmatprep.subr.mxu0 0.0
  %67 = vmatpush2.msra.mxu0 0.0
  %68 = vmatprep.subr.mxu0 0.0
  %69 = vmatpush2.msra.mxu0 0.0
  %70 = vmatprep.subr.mxu0 0.0
  %71 = vmatpush2.msra.mxu0 0.0
  %72 = vmatprep.subr.mxu0 0.0
  %73 = vmatpush2.msra.mxu0 0.0
  %74 = vmatprep.subr.mxu0 0.0
  %75 = vmatpush2.msra.mxu0 0.0
  %76 = vmatprep.subr.mxu0 0.0
  %77 = vmatpush2.msra.mxu0 0.0
  %78 = vmatprep.subr.mxu0 0.0
  %79 = vmatpush2.msra.mxu0 0.0
  %80 = vmatprep.subr.mxu0 0.0
  %81 = vmatpush2.msra.mxu0 0.0
  %82 = vmatprep.subr.mxu0 0.0
  %83 = vmatpush2.msra.mxu0 0.0
  %84 = vmatprep.subr.mxu0 0.0
  %85 = vmatpush2.msra.mxu0 0.0
  %86 = vmatprep.subr.mxu0 0.0
  %87 = vmatpush2.msra.mxu0 0.0
  %88 = vmatprep.subr.mxu0 0.0
  %89 = vmatpush2.msra.mxu0 0.0
  %90 = vmatprep.subr.mxu0 0.0
  %91 = vmatpush2.msra.mxu0 0.0
  %92 = vmatprep.subr.mxu0 0.0
  %93 = vmatpush2.msra.mxu0 0.0
  %94 = vmatprep.subr.mxu0 0.0
  %95 = vmatpush2.msra.mxu0 0.0
  %96 = vmatprep.subr.mxu0 0.0
  %97 = vmatpush2.msra.mxu0 0.0
  %98 = vmatprep.mubr.f32.mxu0 0.0
  %99 = vmatmul.mubr.f32.gmra.mxu0 %v32
  %v100 = vpop.f32.mrf.mxu0
  %v101 = vadd.f32 %v28, %v100
  %v102 = vpop.f32.mrf.mxu0
  %103 = vdwg.mxu0
  %v104 = vmax.f32 %v101, 0.0
  %v105 = vld [vmem:[%s3] sm:$0xff]
  %v106 = vld [vmem:[%s3 + $0x8] sm:$0xff]
  %v107 = vld [vmem:[%s3 + $0x10] sm:$0xff]
  %v108 = vld [vmem:[%s3 + $0x18] sm:$0xff]
  %v109 = vld [vmem:[%s4] sm:$0x1]
  %v111 = vlaneseq
  %v112 = vshrl.u32 %v111, 7
  %v113 = vsub.s32 0, %v112
  %v114 = vrot.slane %v109, %v113
  %vm116 = vcmask 261120
  %v118 = vsel %vm116, %v104, 0
  %120 = vmatprep.subr.mxu0 0.0
  %121 = vmatpush1.msra.mxu0 0.0
  %122 = vmatprep.subr.mxu0 0.0
  %123 = vmatpush1.msra.mxu0 0.0
  %124 = vmatprep.subr.mxu0 0.0
  %125 = vmatpush1.msra.mxu0 0.0
  %126 = vmatprep.subr.mxu0 0.0
  %127 = vmatpush1.msra.mxu0 0.0
  %128 = vmatprep.subr.mxu0 0.0
  %129 = vmatpush1.msra.mxu0 0.0
  %130 = vmatprep.subr.mxu0 0.0
  %131 = vmatpush1.msra.mxu0 0.0
  %132 = vmatprep.subr.mxu0 0.0
  %133 = vmatpush1.msra.mxu0 0.0
  %134 = vmatprep.subr.mxu0 0.0
  %135 = vmatpush1.msra.mxu0 0.0
  %136 = vmatprep.subr.mxu0 0.0
  %137 = vmatpush1.msra.mxu0 0.0
  %138 = vmatprep.subr.mxu0 0.0
  %139 = vmatpush1.msra.mxu0 0.0
  %140 = vmatprep.subr.mxu0 0.0
  %141 = vmatpush1.msra.mxu0 0.0
  %142 = vmatprep.subr.mxu0 0.0
  %143 = vmatpush1.msra.mxu0 0.0
  %144 = vmatprep.subr.mxu0 0.0
  %145 = vmatpush1.msra.mxu0 %v108
  %146 = vmatprep.subr.mxu0 0.0
  %147 = vmatpush1.msra.mxu0 %v107
  %148 = vmatprep.subr.mxu0 0.0
  %149 = vmatpush1.msra.mxu0 %v106
  %150 = vmatprep.subr.mxu0 0.0
  %151 = vmatpush1.msra.mxu0 %v105
  %152 = vmatprep.subr.mxu0 0.0
  %153 = vmatpush2.msra.mxu0 0.0
  %154 = vmatprep.subr.mxu0 0.0
  %155 = vmatpush2.msra.mxu0 0.0
  %156 = vmatprep.subr.mxu0 0.0
  %157 = vmatpush2.msra.mxu0 0.0
  %158 = vmatprep.subr.mxu0 0.0
  %159 = vmatpush2.msra.mxu0 0.0
  %160 = vmatprep.subr.mxu0 0.0
  %161 = vmatpush2.msra.mxu0 0.0
  %162 = vmatprep.subr.mxu0 0.0
  %163 = vmatpush2.msra.mxu0 0.0
  %164 = vmatprep.subr.mxu0 0.0
  %165 = vmatpush2.msra.mxu0 0.0
  %166 = vmatprep.subr.mxu0 0.0
  %167 = vmatpush2.msra.mxu0 0.0
  %168 = vmatprep.subr.mxu0 0.0
  %169 = vmatpush2.msra.mxu0 0.0
  %170 = vmatprep.subr.mxu0 0.0
  %171 = vmatpush2.msra.mxu0 0.0
  %172 = vmatprep.subr.mxu0 0.0
  %173 = vmatpush2.msra.mxu0 0.0
  %174 = vmatprep.subr.mxu0 0.0
  %175 = vmatpush2.msra.mxu0 0.0
  %176 = vmatprep.subr.mxu0 0.0
  %177 = vmatpush2.msra.mxu0 0.0
  %178 = vmatprep.subr.mxu0 0.0
  %179 = vmatpush2.msra.mxu0 0.0
  %180 = vmatprep.subr.mxu0 0.0
  %181 = vmatpush2.msra.mxu0 0.0
  %182 = vmatprep.subr.mxu0 0.0
  %183 = vmatpush2.msra.mxu0 0.0
  %184 = vmatprep.mubr.f32.mxu0 0.0
  %185 = vmatmul.mubr.f32.gmra.mxu0 %v118
  %v186 = vpop.f32.mrf.mxu0
  %v187 = vadd.f32 %v114, %v186
  %v188 = vpop.f32.mrf.mxu0
  %189 = vdwg.mxu0
  %vm190 = vcmask 31744
  %191 = vst.msk [vmem:[%s5] sm:$0xff] %vm190, %v187
  // Predicated region
  $region22: #{qnetwork_forward.1} parent=0 // pred_check
    _
  $region23: #{qnetwork_forward.1} parent=0 // pred_check_branch
    %193 = sbr.rel (0) target = $region25
  $region24: #{qnetwork_forward.1} parent=0 // pred_region
    _
  $region25: #{qnetwork_forward.1} parent=0 // pred_fallthru
    _
  // Predicated region
  $region26: #{qnetwork_forward.1} parent=0 // pred_check
    _
  $region27: #{qnetwork_forward.1} parent=0 // pred_check_branch
    %195 = sbr.rel (0) target = $region29
  $region28: #{qnetwork_forward.1} parent=0 // pred_region
    _
  $region29: #{qnetwork_forward.1} parent=0 // pred_fallthru
    _

</llo_original>
